<compile_context>
chip_gen: v7x
topology: tpu7x:2x2x1
jax: 0.10.0
libtpu: 0.0.40
codegen_flags: <defaults>
</compile_context>

<pallas_src>
import functools

import jax
import jax.numpy as jnp
from jax import lax
from jax.experimental import pallas as pl
from jax.experimental.pallas import tpu as pltpu


def _spatial_attention_kernel(params_ref, x_ref, o_ref, mx_ref, sum_ref,
                              *, C, H, W):
    """Grid = (batch tiles, channel chunks); channel chunks is the reduction axis.

    params_ref : SMEM (19,) f32 -- BN-folded conv taps (9 for the max map,
                 9 for the mean map, row-major over (dh, dw)) + 1 bias.
    x_ref      : VMEM (TB, TC, H*W) input chunk.
    o_ref      : VMEM (TB, H*W) sigmoid attention map (written at last chunk).
    mx_ref     : VMEM (TB, H*W) f32 running channel max   (scratch).
    sum_ref    : VMEM (TB, H*W) f32 running channel sum   (scratch).
    """
    HW = H * W
    ci = pl.program_id(1)
    last = pl.num_programs(1) - 1

    # Partial ChannelPool over this channel chunk.  No whole-tile f32 copy:
    # the max is exact in the input dtype, the sum accumulates in f32.
    x = x_ref[...]                                         # (TB, TC, HW)
    chunk_max = jnp.max(x, axis=1).astype(jnp.float32)     # (TB, HW)
    chunk_sum = jnp.sum(x, axis=1, dtype=jnp.float32)      # (TB, HW)

    @pl.when(ci == 0)
    def _():
        mx_ref[...] = chunk_max
        sum_ref[...] = chunk_sum

    @pl.when(ci != 0)
    def _():
        mx_ref[...] = jnp.maximum(mx_ref[...], chunk_max)
        sum_ref[...] = sum_ref[...] + chunk_sum

    @pl.when(ci == last)
    def _():
        mx = mx_ref[...]
        av = sum_ref[...] * (1.0 / C)
        tb = mx.shape[0]

        # Hoist all SMEM scalar reads into locals once (off the critical path).
        w = [params_ref[i] for i in range(19)]

        # Row / column index of every flat spatial position; the circular wrap
        # introduced by pltpu.roll is always killed by one of these masks, so
        # the result matches a zero-padded ('same') 3x3 convolution exactly.
        flat = lax.broadcasted_iota(jnp.int32, (tb, HW), 1)
        col = lax.rem(flat, W)
        row = lax.div(flat, W)
        need_l = col >= 1            # tap reads column w-1
        need_r = col <= W - 2        # tap reads column w+1
        need_t = row >= 1            # tap reads row h-1
        need_b = row <= H - 2        # tap reads row h+1

        # Center tap (dh=1, dw=1): no shift, no mask.
        acc = w[4] * mx + w[13] * av
        for dh in range(3):                                  # unrolled 3x3 conv
            for dw in range(3):
                if dh == 1 and dw == 1:
                    continue
                d = (dh - 1) * W + (dw - 1)                  # flat tap offset
                sh = (-d) % HW                               # out[p] = in[p + d]
                sm = pltpu.roll(mx, shift=sh, axis=1)
                sa = pltpu.roll(av, shift=sh, axis=1)
                tap = w[dh * 3 + dw] * sm + w[9 + dh * 3 + dw] * sa
                mask = None
                if dh == 0:
                    mask = need_t
                elif dh == 2:
                    mask = need_b
                if dw == 0:
                    mask = need_l if mask is None else jnp.logical_and(mask, need_l)
                elif dw == 2:
                    mask = need_r if mask is None else jnp.logical_and(mask, need_r)
                acc = acc + jnp.where(mask, tap, 0.0)

        o_ref[...] = jax.nn.sigmoid(acc + w[18]).astype(o_ref.dtype)


def _round_up(n, m):
    return (n + m - 1) // m * m


def _vmem_capacity_bytes():
    try:
        cap = getattr(pltpu.get_tpu_info(), "vmem_capacity_bytes", None)
        if cap:
            return int(cap)
    except Exception:
        pass
    return 128 * 1024 * 1024          # v5e / v6e default


def spatial_attention(x, conv_w, bn_gamma, bn_beta, bn_mean, bn_var,
                      *, eps=1e-5, tile_budget_bytes=None, out_dtype=jnp.float32):
    """CBAM SpatialAttention forward.

    x       : (B, C, H, W)  float
    conv_w  : (1, 2, 3, 3)  Conv2d(2,1,3,padding=1,bias=False); in-ch 0 = max, 1 = mean
    bn_*    : scalars (BatchNorm2d(1) affine params + running stats, eval mode)
    returns : (B, 1, H, W)  sigmoid spatial attention map
    """
    B, C, H, W = x.shape
    HW = H * W
    isz = x.dtype.itemsize

    # Fold eval-mode BatchNorm into the conv: y = (conv(x) - mean)*s + beta,
    # s = gamma / sqrt(var + eps)  ->  w_eff = w*s, b_eff = beta - mean*s.
    scale = bn_gamma / jnp.sqrt(bn_var + eps)
    w_eff = (conv_w[0].astype(jnp.float32) * scale).reshape(-1)      # (18,)
    b_eff = jnp.reshape(bn_beta - bn_mean * scale, (1,))             # (1,)
    params = jnp.concatenate([w_eff, b_eff]).astype(jnp.float32)     # (19,)

    # ---- per-generation tile budget ------------------------------------
    vmem_cap = _vmem_capacity_bytes()
    small_vmem = vmem_cap <= 64 * 1024 * 1024          # v7x-class TensorCore
    if tile_budget_bytes is None:
        tile_budget_bytes = (3 if small_vmem else 6) * 1024 * 1024

    # ---- channel chunk TC (reduction grid axis) -------------------------
    # TC must be a multiple of 8 (sublane dim of the block) or the full C, and
    # must divide C so no out-of-bounds garbage enters the running max.
    row_bytes = HW * isz
    if 8 * C * row_bytes <= tile_budget_bytes or C < 8 or C % 8 != 0:
        tc = C                                          # single channel step
    else:
        tc = 8
        for cand in range(C, 7, -8):                    # largest fitting divisor
            if C % cand == 0 and 8 * cand * row_bytes <= tile_budget_bytes:
                tc = cand
                break

    # ---- batch tile TB: multiple of 8 (full sublanes, unmasked stores) ---
    b_ceil = _round_up(B, 8)
    tb = max(8, (tile_budget_bytes // max(1, tc * row_bytes)) // 8 * 8)
    tb = min(tb, b_ceil, 256)
    if b_ceil >= 16:                                    # keep >=2 batch grid steps
        while tb > 8 and -(-b_ceil // tb) < 2:          # (v7x: 2 TensorCores)
            tb -= 8
    b_pad = _round_up(B, tb)

    x_flat = x.reshape(B, C, HW)
    if b_pad != B:
        x_flat = jnp.pad(x_flat, ((0, b_pad - B), (0, 0), (0, 0)))

    grid = (b_pad // tb, C // tc)

    # VMEM accounting: double-buffered in/out tiles + scratch + f32 temps.
    in_tile = tb * tc * HW * isz
    out_tile = tb * HW * jnp.dtype(out_dtype).itemsize
    scratch_bytes = 2 * tb * HW * 4
    vmem_need = 2 * in_tile + 2 * out_tile + scratch_bytes + 12 * tb * HW * 4 + (2 << 20)
    vmem_limit = int(min(0.75 * vmem_cap, max(32 << 20, 2 * vmem_need)))

    cost = pl.CostEstimate(
        flops=int(2 * B * C * HW + 40 * B * HW),
        transcendentals=int(B * HW),
        bytes_accessed=int(B * C * HW * isz
                           + B * HW * jnp.dtype(out_dtype).itemsize + 19 * 4),
    )

    kernel = functools.partial(_spatial_attention_kernel, C=C, H=H, W=W)
    out = pl.pallas_call(
        kernel,
        out_shape=jax.ShapeDtypeStruct((b_pad, HW), out_dtype),
        grid=grid,
        in_specs=[
            pl.BlockSpec(memory_space=pltpu.MemorySpace.SMEM),           # params
            pl.BlockSpec((tb, tc, HW), lambda bi, ci: (bi, ci, 0)),      # x chunk
        ],
        out_specs=pl.BlockSpec((tb, HW), lambda bi, ci: (bi, 0)),        # lane-dense out
        scratch_shapes=[
            pltpu.VMEM((tb, HW), jnp.float32),   # running channel max
            pltpu.VMEM((tb, HW), jnp.float32),   # running channel sum
        ],
        compiler_params=pltpu.CompilerParams(
            dimension_semantics=("parallel", "arbitrary"),
            vmem_limit_bytes=vmem_limit,
        ),
        cost_estimate=cost,
    )(params, x_flat)

    return out[:B].reshape(B, 1, H, W)


def spatial_attention_ref(x, conv_w, bn_gamma, bn_beta, bn_mean, bn_var, eps=1e-5):
    """Pure-JAX reference mirroring the PyTorch forward (eval-mode BN)."""
    mx = jnp.max(x, axis=1, keepdims=True)                              # (B,1,H,W)
    av = jnp.mean(x, axis=1, keepdims=True)                             # (B,1,H,W)
    xc = jnp.concatenate([mx, av], axis=1)                              # (B,2,H,W)
    y = lax.conv_general_dilated(
        xc.astype(jnp.float32), conv_w.astype(jnp.float32),
        window_strides=(1, 1), padding="SAME",
        dimension_numbers=("NCHW", "OIHW", "NCHW"))                     # (B,1,H,W)
    y = (y - bn_mean) / jnp.sqrt(bn_var + eps) * bn_gamma + bn_beta
    return jax.nn.sigmoid(y)


if __name__ == "__main__":
    key = jax.random.PRNGKey(0)
    kx, kw, kg, kb, km, kv = jax.random.split(key, 6)

    B, C, H, W = 2, 4, 16, 16
    x = jax.random.normal(kx, (B, C, H, W), dtype=jnp.float32)

    # Deterministic "trained-ish" parameters.
    conv_w = 0.3 * jax.random.normal(kw, (1, 2, 3, 3), dtype=jnp.float32)
    bn_gamma = 1.0 + 0.1 * jax.random.normal(kg, (), dtype=jnp.float32)
    bn_beta = 0.1 * jax.random.normal(kb, (), dtype=jnp.float32)
    bn_mean = 0.1 * jax.random.normal(km, (), dtype=jnp.float32)
    bn_var = jnp.abs(1.0 + 0.1 * jax.random.normal(kv, (), dtype=jnp.float32))

    out = spatial_attention(x, conv_w, bn_gamma, bn_beta, bn_mean, bn_var)
    out = jax.block_until_ready(out)

    ref = spatial_attention_ref(x, conv_w, bn_gamma, bn_beta, bn_mean, bn_var)
    assert out.shape == (B, 1, H, W)
    assert jnp.allclose(out, ref, atol=1e-5, rtol=1e-5), float(jnp.max(jnp.abs(out - ref)))

    print("KERNEL_OK")
</pallas_src>

<mosaic_0001>
module attributes {stable_mosaic.version = 11 : i64} {
  func.func @_spatial_attention_kernel(%arg0: i32, %arg1: i32, %arg2: memref<19xf32, #tpu.memory_space<smem>>, %arg3: memref<8x4x256xf32, #tpu.memory_space<vmem>>, %arg4: memref<8x256xf32, #tpu.memory_space<vmem>>, %arg5: memref<8x256xf32, #tpu.memory_space<vmem>>, %arg6: memref<8x256xf32, #tpu.memory_space<vmem>>) attributes {dimension_semantics = [#tpu.dimension_semantics<parallel>, #tpu.dimension_semantics<arbitrary>], iteration_bounds = array<i64: 1, 1>, scalar_prefetch = 0 : i64, scratch_operands = 2 : i64, tpu.core_type = #tpu.core_type<tc>, window_params = [{transform_indices = @transform_0, window_bounds = array<i64: 19>}, {transform_indices = @transform_1, window_bounds = array<i64: 8, 4, 256>}, {transform_indices = @transform_2, window_bounds = array<i64: 8, 256>}]} {
    %c0 = arith.constant 0 : index
    %c0_0 = arith.constant 0 : index
    %c0_1 = arith.constant 0 : index
    %0 = vector.load %arg3[%c0, %c0_0, %c0_1] : memref<8x4x256xf32, #tpu.memory_space<vmem>>, vector<8x4x256xf32>
    %cst = arith.constant dense<0xFF800000> : vector<8x256xf32>
    %1 = vector.multi_reduction <maximumf>, %0, %cst [1] : vector<8x4x256xf32> to vector<8x256xf32>
    %cst_2 = arith.constant dense<0.000000e+00> : vector<8x256xf32>
    %2 = vector.multi_reduction <add>, %0, %cst_2 [1] : vector<8x4x256xf32> to vector<8x256xf32>
    %c0_i32 = arith.constant 0 : i32
    %3 = arith.cmpi eq, %arg1, %c0_i32 : i32
    %4 = arith.extui %3 : i1 to i32
    %c0_i32_3 = arith.constant 0 : i32
    %5 = arith.cmpi ne, %4, %c0_i32_3 : i32
    scf.if %5 {
      %c0_8 = arith.constant 0 : index
      %c0_9 = arith.constant 0 : index
      %12 = vector.load %arg5[%c0_8, %c0_9] : memref<8x256xf32, #tpu.memory_space<vmem>>, vector<8x256xf32>
      tpu.vector_store %arg5[%c0_8, %c0_9], %1 {strides = array<i32>} : memref<8x256xf32, #tpu.memory_space<vmem>>, vector<8x256xf32>,
      %c0_10 = arith.constant 0 : index
      %c0_11 = arith.constant 0 : index
      %13 = vector.load %arg6[%c0_10, %c0_11] : memref<8x256xf32, #tpu.memory_space<vmem>>, vector<8x256xf32>
      tpu.vector_store %arg6[%c0_10, %c0_11], %2 {strides = array<i32>} : memref<8x256xf32, #tpu.memory_space<vmem>>, vector<8x256xf32>,
    } else {
    }
    %c0_i32_4 = arith.constant 0 : i32
    %6 = arith.cmpi ne, %arg1, %c0_i32_4 : i32
    %7 = arith.extui %6 : i1 to i32
    %c0_i32_5 = arith.constant 0 : i32
    %8 = arith.cmpi ne, %7, %c0_i32_5 : i32
    scf.if %8 {
      %c0_8 = arith.constant 0 : index
      %c0_9 = arith.constant 0 : index
      %12 = vector.load %arg5[%c0_8, %c0_9] : memref<8x256xf32, #tpu.memory_space<vmem>>, vector<8x256xf32>
      %13 = arith.maximumf %12, %1 : vector<8x256xf32>
      %c0_10 = arith.constant 0 : index
      %c0_11 = arith.constant 0 : index
      %14 = vector.load %arg5[%c0_10, %c0_11] : memref<8x256xf32, #tpu.memory_space<vmem>>, vector<8x256xf32>
      tpu.vector_store %arg5[%c0_10, %c0_11], %13 {strides = array<i32>} : memref<8x256xf32, #tpu.memory_space<vmem>>, vector<8x256xf32>,
      %c0_12 = arith.constant 0 : index
      %c0_13 = arith.constant 0 : index
      %15 = vector.load %arg6[%c0_12, %c0_13] : memref<8x256xf32, #tpu.memory_space<vmem>>, vector<8x256xf32>
      %16 = arith.addf %15, %2 : vector<8x256xf32>
      %c0_14 = arith.constant 0 : index
      %c0_15 = arith.constant 0 : index
      %17 = vector.load %arg6[%c0_14, %c0_15] : memref<8x256xf32, #tpu.memory_space<vmem>>, vector<8x256xf32>
      tpu.vector_store %arg6[%c0_14, %c0_15], %16 {strides = array<i32>} : memref<8x256xf32, #tpu.memory_space<vmem>>, vector<8x256xf32>,
    } else {
    }
    %c0_i32_6 = arith.constant 0 : i32
    %9 = arith.cmpi eq, %arg1, %c0_i32_6 : i32
    %10 = arith.extui %9 : i1 to i32
    %c0_i32_7 = arith.constant 0 : i32
    %11 = arith.cmpi ne, %10, %c0_i32_7 : i32
    scf.if %11 {
      %c0_8 = arith.constant 0 : index
      %c0_9 = arith.constant 0 : index
      %12 = vector.load %arg5[%c0_8, %c0_9] : memref<8x256xf32, #tpu.memory_space<vmem>>, vector<8x256xf32>
      %c0_10 = arith.constant 0 : index
      %c0_11 = arith.constant 0 : index
      %13 = vector.load %arg6[%c0_10, %c0_11] : memref<8x256xf32, #tpu.memory_space<vmem>>, vector<8x256xf32>
      %cst_12 = arith.constant 2.500000e-01 : f32
      %14 = vector.broadcast %cst_12 : f32 to vector<8x256xf32>
      %15 = arith.mulf %13, %14 : vector<8x256xf32>
      %c0_13 = arith.constant 0 : index
      %16 = memref.load %arg2[%c0_13] : memref<19xf32, #tpu.memory_space<smem>>
      %c1 = arith.constant 1 : index
      %17 = memref.load %arg2[%c1] : memref<19xf32, #tpu.memory_space<smem>>
      %c2 = arith.constant 2 : index
      %18 = memref.load %arg2[%c2] : memref<19xf32, #tpu.memory_space<smem>>
      %c3 = arith.constant 3 : index
      %19 = memref.load %arg2[%c3] : memref<19xf32, #tpu.memory_space<smem>>
      %c4 = arith.constant 4 : index
      %20 = memref.load %arg2[%c4] : memref<19xf32, #tpu.memory_space<smem>>
      %c5 = arith.constant 5 : index
      %21 = memref.load %arg2[%c5] : memref<19xf32, #tpu.memory_space<smem>>
      %c6 = arith.constant 6 : index
      %22 = memref.load %arg2[%c6] : memref<19xf32, #tpu.memory_space<smem>>
      %c7 = arith.constant 7 : index
      %23 = memref.load %arg2[%c7] : memref<19xf32, #tpu.memory_space<smem>>
      %c8 = arith.constant 8 : index
      %24 = memref.load %arg2[%c8] : memref<19xf32, #tpu.memory_space<smem>>
      %c9 = arith.constant 9 : index
      %25 = memref.load %arg2[%c9] : memref<19xf32, #tpu.memory_space<smem>>
      %c10 = arith.constant 10 : index
      %26 = memref.load %arg2[%c10] : memref<19xf32, #tpu.memory_space<smem>>
      %c11 = arith.constant 11 : index
      %27 = memref.load %arg2[%c11] : memref<19xf32, #tpu.memory_space<smem>>
      %c12 = arith.constant 12 : index
      %28 = memref.load %arg2[%c12] : memref<19xf32, #tpu.memory_space<smem>>
      %c13 = arith.constant 13 : index
      %29 = memref.load %arg2[%c13] : memref<19xf32, #tpu.memory_space<smem>>
      %c14 = arith.constant 14 : index
      %30 = memref.load %arg2[%c14] : memref<19xf32, #tpu.memory_space<smem>>
      %c15 = arith.constant 15 : index
      %31 = memref.load %arg2[%c15] : memref<19xf32, #tpu.memory_space<smem>>
      %c16 = arith.constant 16 : index
      %32 = memref.load %arg2[%c16] : memref<19xf32, #tpu.memory_space<smem>>
      %c17 = arith.constant 17 : index
      %33 = memref.load %arg2[%c17] : memref<19xf32, #tpu.memory_space<smem>>
      %c18 = arith.constant 18 : index
      %34 = memref.load %arg2[%c18] : memref<19xf32, #tpu.memory_space<smem>>
      %35 = tpu.iota {dimensions = array<i32: 1>} : vector<8x256xi32>
      %c16_i32 = arith.constant 16 : i32
      %36 = vector.broadcast %c16_i32 : i32 to vector<8x256xi32>
      %37 = arith.remsi %35, %36 : vector<8x256xi32>
      %c16_i32_14 = arith.constant 16 : i32
      %38 = vector.broadcast %c16_i32_14 : i32 to vector<8x256xi32>
      %39 = arith.divsi %35, %38 : vector<8x256xi32>
      %c1_i32 = arith.constant 1 : i32
      %40 = vector.broadcast %c1_i32 : i32 to vector<8x256xi32>
      %41 = arith.cmpi sge, %37, %40 : vector<8x256xi32>
      %c14_i32 = arith.constant 14 : i32
      %42 = vector.broadcast %c14_i32 : i32 to vector<8x256xi32>
      %43 = arith.cmpi sle, %37, %42 : vector<8x256xi32>
      %c1_i32_15 = arith.constant 1 : i32
      %44 = vector.broadcast %c1_i32_15 : i32 to vector<8x256xi32>
      %45 = arith.cmpi sge, %39, %44 : vector<8x256xi32>
      %c14_i32_16 = arith.constant 14 : i32
      %46 = vector.broadcast %c14_i32_16 : i32 to vector<8x256xi32>
      %47 = arith.cmpi sle, %39, %46 : vector<8x256xi32>
      %48 = vector.broadcast %20 : f32 to vector<8x256xf32>
      %49 = arith.mulf %48, %12 : vector<8x256xf32>
      %50 = vector.broadcast %29 : f32 to vector<8x256xf32>
      %51 = arith.mulf %50, %15 : vector<8x256xf32>
      %52 = arith.addf %49, %51 : vector<8x256xf32>
      %c17_i32 = arith.constant 17 : i32
      %53 = tpu.dynamic_rotate %12 by %c17_i32 dim 1 : vector<8x256xf32>, i32 -> vector<8x256xf32>
      %c17_i32_17 = arith.constant 17 : i32
      %54 = tpu.dynamic_rotate %15 by %c17_i32_17 dim 1 : vector<8x256xf32>, i32 -> vector<8x256xf32>
      %55 = vector.broadcast %16 : f32 to vector<8x256xf32>
      %56 = arith.mulf %55, %53 : vector<8x256xf32>
      %57 = vector.broadcast %25 : f32 to vector<8x256xf32>
      %58 = arith.mulf %57, %54 : vector<8x256xf32>
      %59 = arith.addf %56, %58 : vector<8x256xf32>
      %60 = arith.andi %45, %41 : vector<8x256xi1>
      %cst_18 = arith.constant 0.000000e+00 : f32
      %61 = vector.broadcast %cst_18 : f32 to vector<8x256xf32>
      %62 = arith.select %60, %59, %61 : vector<8x256xi1>, vector<8x256xf32>
      %63 = arith.addf %52, %62 : vector<8x256xf32>
      %c16_i32_19 = arith.constant 16 : i32
      %64 = tpu.dynamic_rotate %12 by %c16_i32_19 dim 1 : vector<8x256xf32>, i32 -> vector<8x256xf32>
      %c16_i32_20 = arith.constant 16 : i32
      %65 = tpu.dynamic_rotate %15 by %c16_i32_20 dim 1 : vector<8x256xf32>, i32 -> vector<8x256xf32>
      %66 = vector.broadcast %17 : f32 to vector<8x256xf32>
      %67 = arith.mulf %66, %64 : vector<8x256xf32>
      %68 = vector.broadcast %26 : f32 to vector<8x256xf32>
      %69 = arith.mulf %68, %65 : vector<8x256xf32>
      %70 = arith.addf %67, %69 : vector<8x256xf32>
      %cst_21 = arith.constant 0.000000e+00 : f32
      %71 = vector.broadcast %cst_21 : f32 to vector<8x256xf32>
      %72 = arith.select %45, %70, %71 : vector<8x256xi1>, vector<8x256xf32>
      %73 = arith.addf %63, %72 : vector<8x256xf32>
      %c15_i32 = arith.constant 15 : i32
      %74 = tpu.dynamic_rotate %12 by %c15_i32 dim 1 : vector<8x256xf32>, i32 -> vector<8x256xf32>
      %c15_i32_22 = arith.constant 15 : i32
      %75 = tpu.dynamic_rotate %15 by %c15_i32_22 dim 1 : vector<8x256xf32>, i32 -> vector<8x256xf32>
      %76 = vector.broadcast %18 : f32 to vector<8x256xf32>
      %77 = arith.mulf %76, %74 : vector<8x256xf32>
      %78 = vector.broadcast %27 : f32 to vector<8x256xf32>
      %79 = arith.mulf %78, %75 : vector<8x256xf32>
      %80 = arith.addf %77, %79 : vector<8x256xf32>
      %81 = arith.andi %45, %43 : vector<8x256xi1>
      %cst_23 = arith.constant 0.000000e+00 : f32
      %82 = vector.broadcast %cst_23 : f32 to vector<8x256xf32>
      %83 = arith.select %81, %80, %82 : vector<8x256xi1>, vector<8x256xf32>
      %84 = arith.addf %73, %83 : vector<8x256xf32>
      %c1_i32_24 = arith.constant 1 : i32
      %85 = tpu.dynamic_rotate %12 by %c1_i32_24 dim 1 : vector<8x256xf32>, i32 -> vector<8x256xf32>
      %c1_i32_25 = arith.constant 1 : i32
      %86 = tpu.dynamic_rotate %15 by %c1_i32_25 dim 1 : vector<8x256xf32>, i32 -> vector<8x256xf32>
      %87 = vector.broadcast %19 : f32 to vector<8x256xf32>
      %88 = arith.mulf %87, %85 : vector<8x256xf32>
      %89 = vector.broadcast %28 : f32 to vector<8x256xf32>
      %90 = arith.mulf %89, %86 : vector<8x256xf32>
      %91 = arith.addf %88, %90 : vector<8x256xf32>
      %cst_26 = arith.constant 0.000000e+00 : f32
      %92 = vector.broadcast %cst_26 : f32 to vector<8x256xf32>
      %93 = arith.select %41, %91, %92 : vector<8x256xi1>, vector<8x256xf32>
      %94 = arith.addf %84, %93 : vector<8x256xf32>
      %c255_i32 = arith.constant 255 : i32
      %95 = tpu.dynamic_rotate %12 by %c255_i32 dim 1 : vector<8x256xf32>, i32 -> vector<8x256xf32>
      %c255_i32_27 = arith.constant 255 : i32
      %96 = tpu.dynamic_rotate %15 by %c255_i32_27 dim 1 : vector<8x256xf32>, i32 -> vector<8x256xf32>
      %97 = vector.broadcast %21 : f32 to vector<8x256xf32>
      %98 = arith.mulf %97, %95 : vector<8x256xf32>
      %99 = vector.broadcast %30 : f32 to vector<8x256xf32>
      %100 = arith.mulf %99, %96 : vector<8x256xf32>
      %101 = arith.addf %98, %100 : vector<8x256xf32>
      %cst_28 = arith.constant 0.000000e+00 : f32
      %102 = vector.broadcast %cst_28 : f32 to vector<8x256xf32>
      %103 = arith.select %43, %101, %102 : vector<8x256xi1>, vector<8x256xf32>
      %104 = arith.addf %94, %103 : vector<8x256xf32>
      %c241_i32 = arith.constant 241 : i32
      %105 = tpu.dynamic_rotate %12 by %c241_i32 dim 1 : vector<8x256xf32>, i32 -> vector<8x256xf32>
      %c241_i32_29 = arith.constant 241 : i32
      %106 = tpu.dynamic_rotate %15 by %c241_i32_29 dim 1 : vector<8x256xf32>, i32 -> vector<8x256xf32>
      %107 = vector.broadcast %22 : f32 to vector<8x256xf32>
      %108 = arith.mulf %107, %105 : vector<8x256xf32>
      %109 = vector.broadcast %31 : f32 to vector<8x256xf32>
      %110 = arith.mulf %109, %106 : vector<8x256xf32>
      %111 = arith.addf %108, %110 : vector<8x256xf32>
      %112 = arith.andi %47, %41 : vector<8x256xi1>
      %cst_30 = arith.constant 0.000000e+00 : f32
      %113 = vector.broadcast %cst_30 : f32 to vector<8x256xf32>
      %114 = arith.select %112, %111, %113 : vector<8x256xi1>, vector<8x256xf32>
      %115 = arith.addf %104, %114 : vector<8x256xf32>
      %c240_i32 = arith.constant 240 : i32
      %116 = tpu.dynamic_rotate %12 by %c240_i32 dim 1 : vector<8x256xf32>, i32 -> vector<8x256xf32>
      %c240_i32_31 = arith.constant 240 : i32
      %117 = tpu.dynamic_rotate %15 by %c240_i32_31 dim 1 : vector<8x256xf32>, i32 -> vector<8x256xf32>
      %118 = vector.broadcast %23 : f32 to vector<8x256xf32>
      %119 = arith.mulf %118, %116 : vector<8x256xf32>
      %120 = vector.broadcast %32 : f32 to vector<8x256xf32>
      %121 = arith.mulf %120, %117 : vector<8x256xf32>
      %122 = arith.addf %119, %121 : vector<8x256xf32>
      %cst_32 = arith.constant 0.000000e+00 : f32
      %123 = vector.broadcast %cst_32 : f32 to vector<8x256xf32>
      %124 = arith.select %47, %122, %123 : vector<8x256xi1>, vector<8x256xf32>
      %125 = arith.addf %115, %124 : vector<8x256xf32>
      %c239_i32 = arith.constant 239 : i32
      %126 = tpu.dynamic_rotate %12 by %c239_i32 dim 1 : vector<8x256xf32>, i32 -> vector<8x256xf32>
      %c239_i32_33 = arith.constant 239 : i32
      %127 = tpu.dynamic_rotate %15 by %c239_i32_33 dim 1 : vector<8x256xf32>, i32 -> vector<8x256xf32>
      %128 = vector.broadcast %24 : f32 to vector<8x256xf32>
      %129 = arith.mulf %128, %126 : vector<8x256xf32>
      %130 = vector.broadcast %33 : f32 to vector<8x256xf32>
      %131 = arith.mulf %130, %127 : vector<8x256xf32>
      %132 = arith.addf %129, %131 : vector<8x256xf32>
      %133 = arith.andi %47, %43 : vector<8x256xi1>
      %cst_34 = arith.constant 0.000000e+00 : f32
      %134 = vector.broadcast %cst_34 : f32 to vector<8x256xf32>
      %135 = arith.select %133, %132, %134 : vector<8x256xi1>, vector<8x256xf32>
      %136 = arith.addf %125, %135 : vector<8x256xf32>
      %137 = vector.broadcast %34 : f32 to vector<8x256xf32>
      %138 = arith.addf %136, %137 : vector<8x256xf32>
      %139 = arith.negf %138 : vector<8x256xf32>
      %140 = math.exp %139 : vector<8x256xf32>
      %cst_35 = arith.constant 1.000000e+00 : f32
      %141 = vector.broadcast %cst_35 : f32 to vector<8x256xf32>
      %142 = arith.addf %141, %140 : vector<8x256xf32>
      %143 = arith.divf %141, %142 : vector<8x256xf32>
      %c0_36 = arith.constant 0 : index
      %c0_37 = arith.constant 0 : index
      %144 = vector.load %arg4[%c0_36, %c0_37] : memref<8x256xf32, #tpu.memory_space<vmem>>, vector<8x256xf32>
      tpu.vector_store %arg4[%c0_36, %c0_37], %143 {strides = array<i32>} : memref<8x256xf32, #tpu.memory_space<vmem>>, vector<8x256xf32>,
    } else {
    }
    return
  }
  func.func @transform_0(%arg0: i32, %arg1: i32) -> i32 {
    %c0_i32 = arith.constant 0 : i32
    %c0_i32_0 = arith.constant 0 : i32
    return %c0_i32 : i32
  }
  func.func @transform_1(%arg0: i32, %arg1: i32) -> (i32, i32, i32) {
    %c0_i32 = arith.constant 0 : i32
    %c0_i32_0 = arith.constant 0 : i32
    return %arg0, %arg1, %c0_i32 : i32, i32, i32
  }
  func.func @transform_2(%arg0: i32, %arg1: i32) -> (i32, i32) {
    %c0_i32 = arith.constant 0 : i32
    %c0_i32_0 = arith.constant 0 : i32
    return %arg0, %c0_i32 : i32, i32
  }
}

</mosaic_0001>

<llo_original>
// kernel: tpu_custom_call.1
$region0: #{tpu_custom_call.1}
  #allocation0 [shape = 'u32[]', space=smem, size = 0x4, offset = 0x4, fixed_abs, tag = 'smem constant byte address 0x4 - core index']
  #allocation1 [shape = 'u32[144,128]{1,0:T(1,128)}', space=vmem, size = 0x12000, scoped, tag = 'internal scratch']
  #allocation2 [shape = 'f32[8,256]{1,0:T(8,128)}', space=vmem, size = 0x2000, scoped, tag = 'scratch operand']
  #allocation3 [shape = 'f32[8,256]{1,0:T(8,128)}', space=vmem, size = 0x2000, scoped, tag = 'scratch operand']
  %s0 = inlined_call_operand.hbm [shape: f32[19], index: 0, kind: input, shape index: {}]
  %s1 = inlined_call_operand.hbm [shape: f32[8,4,256], index: 1, kind: input, shape index: {}]
  %s2 = inlined_call_operand.hbm [shape: f32[8,256], index: 2, kind: output, shape index: {}]
  %s3 = sld [smem:[#allocation0]]
  $region38: #{tpu_custom_call.1} parent=0
    _
  %s5 = ssub.s32 1, %s3
  %s6 = scalar_select 0, %s5, %s3
  $region1: #{tpu_custom_call.1} parent=0
    #allocation4 [shape = 'u8[512]{0}', space=smem, size = 0x200, scoped, tag = 'input window, operand 0, single buffered']
    #allocation5 [shape = 's32[1]{0}', space=sflag, size = 0x4, scoped, tag = 'scoped memory for tpu_custom_call.1']
    #allocation6 [shape = 's32[1]{0}', space=sflag, size = 0x4, scoped, tag = 'scoped memory for tpu_custom_call.1']
    #allocation7 [shape = 's32[1]{0}', space=sflag, size = 0x4, scoped, tag = 'scoped memory for tpu_custom_call.1']
    #allocation8 [shape = 'u8[32768]{0}', space=vmem, size = 0x8000, scoped, tag = 'input window, operand 1, single buffered']
    #allocation9 [shape = 'u8[8192]{0}', space=vmem, size = 0x2000, scoped, tag = 'output window, operand 0, single buffered']
    %7 = vsyncpa [#allocation7], 0
    %8 = vsyncpa [#allocation5], 0
    %9 = vsyncpa [#allocation6], 0
    // Predicated region
    $region2: #{tpu_custom_call.1} parent=1 // pred_check
      _
    $region3: #{tpu_custom_call.1} parent=1 // pred_check_branch
      %11 = sbr.rel (0) target = $region5
    $region4: #{tpu_custom_call.1} parent=1 // pred_region
      %s13 = ssub.s32 16, 16
      %14 = vsyncadd [#allocation7], %s13
      %17 = dma.hbm_to_smem %s0, 16, [#allocation4], [#allocation7]
    $region5: #{tpu_custom_call.1} parent=1 // pred_fallthru
      _
    // Predicated region
    $region6: #{tpu_custom_call.1} parent=1 // pred_check
      _
    $region7: #{tpu_custom_call.1} parent=1 // pred_check_branch
      %19 = sbr.rel (0) target = $region9
    $region8: #{tpu_custom_call.1} parent=1 // pred_region
      %s21 = ssub.s32 1024, 1024
      %22 = vsyncadd [#allocation5], %s21
      %s23 = sshll.u32 [#allocation8], 4
      %s24 = int_to_ptr.vmem [resolvable:$true] %s23
      %29 = dma.hbm_to_vmem [thread:$0]  %s1, 1024, %s24, [#allocation5], 128, 128, 8
    $region9: #{tpu_custom_call.1} parent=1 // pred_fallthru
      _
    // Predicated region
    $region10: #{tpu_custom_call.1} parent=1 // pred_check
      _
    $region11: #{tpu_custom_call.1} parent=1 // pred_check_branch
      %31 = sbr.rel (0) target = $region13
    $region12: #{tpu_custom_call.1} parent=1 // pred_region
      %32 = dma.done [#allocation7], 16
    $region13: #{tpu_custom_call.1} parent=1 // pred_fallthru
      _
    // Predicated region
    $region14: #{tpu_custom_call.1} parent=1 // pred_check
      _
    $region15: #{tpu_custom_call.1} parent=1 // pred_check_branch
      %34 = sbr.rel (0) target = $region17
    $region16: #{tpu_custom_call.1} parent=1 // pred_region
      %35 = dma.done [#allocation5], 1024
    $region17: #{tpu_custom_call.1} parent=1 // pred_fallthru
      _
    %36 = sfence
    %v37 = vld [vmem:[#allocation8] sm:$0xff]
    %v38 = vld [vmem:[#allocation8 + $0x8] sm:$0xff]
    %v39 = vld [vmem:[#allocation8 + $0x10] sm:$0xff]
    %v40 = vld [vmem:[#allocation8 + $0x18] sm:$0xff]
    %v41 = vld [vmem:[#allocation8 + $0x20] sm:$0xff]
    %v42 = vld [vmem:[#allocation8 + $0x28] sm:$0xff]
    %v43 = vld [vmem:[#allocation8 + $0x30] sm:$0xff]
    %v44 = vld [vmem:[#allocation8 + $0x38] sm:$0xff]
    %v53 = vcombine.high %v37, %v37
    %v54 = vcombine.high %v38, %v38
    %v55 = vcombine.high %v39, %v39
    %v56 = vcombine.high %v40, %v40
    %v57 = vcombine.high %v41, %v41
    %v58 = vcombine.high %v42, %v42
    %v59 = vcombine.high %v43, %v43
    %v60 = vcombine.high %v44, %v44
    %vm69 = vcmask 1043456
    %v70 = vsel %vm69, %v37, -inf
    %v71 = vrot.slane %v70, 4
    %v72 = vmax.f32 %v70, %v71
    %v73 = vrot.slane %v72, 2
    %v74 = vmax.f32 %v72, %v73
    %v75 = vrot.slane %v74, 1
    %v76 = vmax.f32 %v74, %v75
    %v77 = vsel %vm69, %v53, -inf
    %v78 = vrot.slane %v77, 4
    %v79 = vmax.f32 %v77, %v78
    %v80 = vrot.slane %v79, 2
    %v81 = vmax.f32 %v79, %v80
    %v82 = vrot.slane %v81, 1
    %v83 = vmax.f32 %v81, %v82
    %v84 = vsel %vm69, %v38, -inf
    %v85 = vrot.slane %v84, 4
    %v86 = vmax.f32 %v84, %v85
    %v87 = vrot.slane %v86, 2
    %v88 = vmax.f32 %v86, %v87
    %v89 = vrot.slane %v88, 1
    %v90 = vmax.f32 %v88, %v89
    %v91 = vsel %vm69, %v54, -inf
    %v92 = vrot.slane %v91, 4
    %v93 = vmax.f32 %v91, %v92
    %v94 = vrot.slane %v93, 2
    %v95 = vmax.f32 %v93, %v94
    %v96 = vrot.slane %v95, 1
    %v97 = vmax.f32 %v95, %v96
    %v98 = vsel %vm69, %v39, -inf
    %v99 = vrot.slane %v98, 4
    %v100 = vmax.f32 %v98, %v99
    %v101 = vrot.slane %v100, 2
    %v102 = vmax.f32 %v100, %v101
    %v103 = vrot.slane %v102, 1
    %v104 = vmax.f32 %v102, %v103
    %v105 = vsel %vm69, %v55, -inf
    %v106 = vrot.slane %v105, 4
    %v107 = vmax.f32 %v105, %v106
    %v108 = vrot.slane %v107, 2
    %v109 = vmax.f32 %v107, %v108
    %v110 = vrot.slane %v109, 1
    %v111 = vmax.f32 %v109, %v110
    %v112 = vsel %vm69, %v40, -inf
    %v113 = vrot.slane %v112, 4
    %v114 = vmax.f32 %v112, %v113
    %v115 = vrot.slane %v114, 2
    %v116 = vmax.f32 %v114, %v115
    %v117 = vrot.slane %v116, 1
    %v118 = vmax.f32 %v116, %v117
    %v119 = vsel %vm69, %v56, -inf
    %v120 = vrot.slane %v119, 4
    %v121 = vmax.f32 %v119, %v120
    %v122 = vrot.slane %v121, 2
    %v123 = vmax.f32 %v121, %v122
    %v124 = vrot.slane %v123, 1
    %v125 = vmax.f32 %v123, %v124
    %v126 = vsel %vm69, %v41, -inf
    %v127 = vrot.slane %v126, 4
    %v128 = vmax.f32 %v126, %v127
    %v129 = vrot.slane %v128, 2
    %v130 = vmax.f32 %v128, %v129
    %v131 = vrot.slane %v130, 1
    %v132 = vmax.f32 %v130, %v131
    %v133 = vsel %vm69, %v57, -inf
    %v134 = vrot.slane %v133, 4
    %v135 = vmax.f32 %v133, %v134
    %v136 = vrot.slane %v135, 2
    %v137 = vmax.f32 %v135, %v136
    %v138 = vrot.slane %v137, 1
    %v139 = vmax.f32 %v137, %v138
    %v140 = vsel %vm69, %v42, -inf
    %v141 = vrot.slane %v140, 4
    %v142 = vmax.f32 %v140, %v141
    %v143 = vrot.slane %v142, 2
    %v144 = vmax.f32 %v142, %v143
    %v145 = vrot.slane %v144, 1
    %v146 = vmax.f32 %v144, %v145
    %v147 = vsel %vm69, %v58, -inf
    %v148 = vrot.slane %v147, 4
    %v149 = vmax.f32 %v147, %v148
    %v150 = vrot.slane %v149, 2
    %v151 = vmax.f32 %v149, %v150
    %v152 = vrot.slane %v151, 1
    %v153 = vmax.f32 %v151, %v152
    %v154 = vsel %vm69, %v43, -inf
    %v155 = vrot.slane %v154, 4
    %v156 = vmax.f32 %v154, %v155
    %v157 = vrot.slane %v156, 2
    %v158 = vmax.f32 %v156, %v157
    %v159 = vrot.slane %v158, 1
    %v160 = vmax.f32 %v158, %v159
    %v161 = vsel %vm69, %v59, -inf
    %v162 = vrot.slane %v161, 4
    %v163 = vmax.f32 %v161, %v162
    %v164 = vrot.slane %v163, 2
    %v165 = vmax.f32 %v163, %v164
    %v166 = vrot.slane %v165, 1
    %v167 = vmax.f32 %v165, %v166
    %v168 = vsel %vm69, %v44, -inf
    %v169 = vrot.slane %v168, 4
    %v170 = vmax.f32 %v168, %v169
    %v171 = vrot.slane %v170, 2
    %v172 = vmax.f32 %v170, %v171
    %v173 = vrot.slane %v172, 1
    %v174 = vmax.f32 %v172, %v173
    %v175 = vsel %vm69, %v60, -inf
    %v176 = vrot.slane %v175, 4
    %v177 = vmax.f32 %v175, %v176
    %v178 = vrot.slane %v177, 2
    %v179 = vmax.f32 %v177, %v178
    %v180 = vrot.slane %v179, 1
    %v181 = vmax.f32 %v179, %v180
    %v182 = vsel %vm69, %v37, 0.0
    %v183 = vrot.slane %v182, 4
    %v184 = vadd.f32 %v182, %v183
    %v185 = vrot.slane %v184, 2
    %v186 = vadd.f32 %v184, %v185
    %v187 = vrot.slane %v186, 1
    %v188 = vadd.f32 %v186, %v187
    %v189 = vsel %vm69, %v53, 0.0
    %v190 = vrot.slane %v189, 4
    %v191 = vadd.f32 %v189, %v190
    %v192 = vrot.slane %v191, 2
    %v193 = vadd.f32 %v191, %v192
    %v194 = vrot.slane %v193, 1
    %v195 = vadd.f32 %v193, %v194
    %v196 = vsel %vm69, %v38, 0.0
    %v197 = vrot.slane %v196, 4
    %v198 = vadd.f32 %v196, %v197
    %v199 = vrot.slane %v198, 2
    %v200 = vadd.f32 %v198, %v199
    %v201 = vrot.slane %v200, 1
    %v202 = vadd.f32 %v200, %v201
    %v203 = vsel %vm69, %v54, 0.0
    %v204 = vrot.slane %v203, 4
    %v205 = vadd.f32 %v203, %v204
    %v206 = vrot.slane %v205, 2
    %v207 = vadd.f32 %v205, %v206
    %v208 = vrot.slane %v207, 1
    %v209 = vadd.f32 %v207, %v208
    %v210 = vsel %vm69, %v39, 0.0
    %v211 = vrot.slane %v210, 4
    %v212 = vadd.f32 %v210, %v211
    %v213 = vrot.slane %v212, 2
    %v214 = vadd.f32 %v212, %v213
    %v215 = vrot.slane %v214, 1
    %v216 = vadd.f32 %v214, %v215
    %v217 = vsel %vm69, %v55, 0.0
    %v218 = vrot.slane %v217, 4
    %v219 = vadd.f32 %v217, %v218
    %v220 = vrot.slane %v219, 2
    %v221 = vadd.f32 %v219, %v220
    %v222 = vrot.slane %v221, 1
    %v223 = vadd.f32 %v221, %v222
    %v224 = vsel %vm69, %v40, 0.0
    %v225 = vrot.slane %v224, 4
    %v226 = vadd.f32 %v224, %v225
    %v227 = vrot.slane %v226, 2
    %v228 = vadd.f32 %v226, %v227
    %v229 = vrot.slane %v228, 1
    %v230 = vadd.f32 %v228, %v229
    %v231 = vsel %vm69, %v56, 0.0
    %v232 = vrot.slane %v231, 4
    %v233 = vadd.f32 %v231, %v232
    %v234 = vrot.slane %v233, 2
    %v235 = vadd.f32 %v233, %v234
    %v236 = vrot.slane %v235, 1
    %v237 = vadd.f32 %v235, %v236
    %v238 = vsel %vm69, %v41, 0.0
    %v239 = vrot.slane %v238, 4
    %v240 = vadd.f32 %v238, %v239
    %v241 = vrot.slane %v240, 2
    %v242 = vadd.f32 %v240, %v241
    %v243 = vrot.slane %v242, 1
    %v244 = vadd.f32 %v242, %v243
    %v245 = vsel %vm69, %v57, 0.0
    %v246 = vrot.slane %v245, 4
    %v247 = vadd.f32 %v245, %v246
    %v248 = vrot.slane %v247, 2
    %v249 = vadd.f32 %v247, %v248
    %v250 = vrot.slane %v249, 1
    %v251 = vadd.f32 %v249, %v250
    %v252 = vsel %vm69, %v42, 0.0
    %v253 = vrot.slane %v252, 4
    %v254 = vadd.f32 %v252, %v253
    %v255 = vrot.slane %v254, 2
    %v256 = vadd.f32 %v254, %v255
    %v257 = vrot.slane %v256, 1
    %v258 = vadd.f32 %v256, %v257
    %v259 = vsel %vm69, %v58, 0.0
    %v260 = vrot.slane %v259, 4
    %v261 = vadd.f32 %v259, %v260
    %v262 = vrot.slane %v261, 2
    %v263 = vadd.f32 %v261, %v262
    %v264 = vrot.slane %v263, 1
    %v265 = vadd.f32 %v263, %v264
    %v266 = vsel %vm69, %v43, 0.0
    %v267 = vrot.slane %v266, 4
    %v268 = vadd.f32 %v266, %v267
    %v269 = vrot.slane %v268, 2
    %v270 = vadd.f32 %v268, %v269
    %v271 = vrot.slane %v270, 1
    %v272 = vadd.f32 %v270, %v271
    %v273 = vsel %vm69, %v59, 0.0
    %v274 = vrot.slane %v273, 4
    %v275 = vadd.f32 %v273, %v274
    %v276 = vrot.slane %v275, 2
    %v277 = vadd.f32 %v275, %v276
    %v278 = vrot.slane %v277, 1
    %v279 = vadd.f32 %v277, %v278
    %v280 = vsel %vm69, %v44, 0.0
    %v281 = vrot.slane %v280, 4
    %v282 = vadd.f32 %v280, %v281
    %v283 = vrot.slane %v282, 2
    %v284 = vadd.f32 %v282, %v283
    %v285 = vrot.slane %v284, 1
    %v286 = vadd.f32 %v284, %v285
    %v287 = vsel %vm69, %v60, 0.0
    %v288 = vrot.slane %v287, 4
    %v289 = vadd.f32 %v287, %v288
    %v290 = vrot.slane %v289, 2
    %v291 = vadd.f32 %v289, %v290
    %v292 = vrot.slane %v291, 1
    %v293 = vadd.f32 %v291, %v292
    %p294 = scmp.eq.s32.totalorder 0, 0
    // Predicated region
    $region18: #{tpu_custom_call.1} parent=1 // pred_check
      %p295 = pneg %p294
    $region19: #{tpu_custom_call.1} parent=1 // pred_check_branch
      %297 = sbr.rel (%p295) target = $region21
    $region20: #{tpu_custom_call.1} parent=1 // pred_region
      %vm314 = vcmask 1041409
      %v315 = vsel %vm314, %v90, %v76
      %vm316 = vcmask 1042434
      %v317 = vsel %vm316, %v104, %v315
      %vm318 = vcmask 1043459
      %v319 = vsel %vm318, %v118, %v317
      %vm320 = vcmask 1044484
      %v321 = vsel %vm320, %v132, %v319
      %vm322 = vcmask 1045509
      %v323 = vsel %vm322, %v146, %v321
      %vm324 = vcmask 1046534
      %v325 = vsel %vm324, %v160, %v323
      %vm326 = vcmask 1047559
      %v327 = vsel %vm326, %v174, %v325
      %v328 = vsel %vm314, %v97, %v83
      %v329 = vsel %vm316, %v111, %v328
      %v330 = vsel %vm318, %v125, %v329
      %v331 = vsel %vm320, %v139, %v330
      %v332 = vsel %vm322, %v153, %v331
      %v333 = vsel %vm324, %v167, %v332
      %v334 = vsel %vm326, %v181, %v333
      %337 = vst [vmem:[#allocation2] sm:$0xff] %v327
      %338 = vst [vmem:[#allocation2 + $0x8] sm:$0xff] %v334
      %v355 = vsel %vm314, %v202, %v188
      %v356 = vsel %vm316, %v216, %v355
      %v357 = vsel %vm318, %v230, %v356
      %v358 = vsel %vm320, %v244, %v357
      %v359 = vsel %vm322, %v258, %v358
      %v360 = vsel %vm324, %v272, %v359
      %v361 = vsel %vm326, %v286, %v360
      %v362 = vsel %vm314, %v209, %v195
      %v363 = vsel %vm316, %v223, %v362
      %v364 = vsel %vm318, %v237, %v363
      %v365 = vsel %vm320, %v251, %v364
      %v366 = vsel %vm322, %v265, %v365
      %v367 = vsel %vm324, %v279, %v366
      %v368 = vsel %vm326, %v293, %v367
      %371 = vst [vmem:[#allocation3] sm:$0xff] %v361
      %372 = vst [vmem:[#allocation3 + $0x8] sm:$0xff] %v368
    $region21: #{tpu_custom_call.1} parent=1 // pred_fallthru
      _
    %p373 = scmp.ne.s32.totalorder 0, 0
    // Predicated region
    $region22: #{tpu_custom_call.1} parent=1 // pred_check
      %p374 = pneg %p373
    $region23: #{tpu_custom_call.1} parent=1 // pred_check_branch
      %376 = sbr.rel (%p374) target = $region25
    $region24: #{tpu_custom_call.1} parent=1 // pred_region
      %v377 = vld [vmem:[#allocation2] sm:$0xff]
      %v378 = vld [vmem:[#allocation2 + $0x8] sm:$0xff]
      %vm395 = vcmask 1041409
      %v396 = vsel %vm395, %v90, %v76
      %vm397 = vcmask 1042434
      %v398 = vsel %vm397, %v104, %v396
      %vm399 = vcmask 1043459
      %v400 = vsel %vm399, %v118, %v398
      %vm401 = vcmask 1044484
      %v402 = vsel %vm401, %v132, %v400
      %vm403 = vcmask 1045509
      %v404 = vsel %vm403, %v146, %v402
      %vm405 = vcmask 1046534
      %v406 = vsel %vm405, %v160, %v404
      %vm407 = vcmask 1047559
      %v408 = vsel %vm407, %v174, %v406
      %v409 = vsel %vm395, %v97, %v83
      %v410 = vsel %vm397, %v111, %v409
      %v411 = vsel %vm399, %v125, %v410
      %v412 = vsel %vm401, %v139, %v411
      %v413 = vsel %vm403, %v153, %v412
      %v414 = vsel %vm405, %v167, %v413
      %v415 = vsel %vm407, %v181, %v414
      %v418 = vmax.f32 %v377, %v408
      %v419 = vmax.f32 %v378, %v415
      %420 = vst [vmem:[#allocation2] sm:$0xff] %v418
      %421 = vst [vmem:[#allocation2 + $0x8] sm:$0xff] %v419
      %v422 = vld [vmem:[#allocation3] sm:$0xff]
      %v423 = vld [vmem:[#allocation3 + $0x8] sm:$0xff]
      %v440 = vsel %vm395, %v202, %v188
      %v441 = vsel %vm397, %v216, %v440
      %v442 = vsel %vm399, %v230, %v441
      %v443 = vsel %vm401, %v244, %v442
      %v444 = vsel %vm403, %v258, %v443
      %v445 = vsel %vm405, %v272, %v444
      %v446 = vsel %vm407, %v286, %v445
      %v447 = vsel %vm395, %v209, %v195
      %v448 = vsel %vm397, %v223, %v447
      %v449 = vsel %vm399, %v237, %v448
      %v450 = vsel %vm401, %v251, %v449
      %v451 = vsel %vm403, %v265, %v450
      %v452 = vsel %vm405, %v279, %v451
      %v453 = vsel %vm407, %v293, %v452
      %v456 = vadd.f32 %v422, %v446
      %v457 = vadd.f32 %v423, %v453
      %458 = vst [vmem:[#allocation3] sm:$0xff] %v456
      %459 = vst [vmem:[#allocation3 + $0x8] sm:$0xff] %v457
    $region25: #{tpu_custom_call.1} parent=1 // pred_fallthru
      _
    // Predicated region
    $region26: #{tpu_custom_call.1} parent=1 // pred_check
      %p460 = pneg %p294
    $region27: #{tpu_custom_call.1} parent=1 // pred_check_branch
      %462 = sbr.rel (%p460) target = $region29
    $region28: #{tpu_custom_call.1} parent=1 // pred_region
      %v463 = vld [vmem:[#allocation2] sm:$0xff]
      %v464 = vld [vmem:[#allocation2 + $0x8] sm:$0xff]
      %v465 = vld [vmem:[#allocation3] sm:$0xff]
      %v466 = vld [vmem:[#allocation3 + $0x8] sm:$0xff]
      %v467 = vmul.f32 %v465, 0.25
      %v468 = vmul.f32 %v466, 0.25
      %s469 = sld [smem:[#allocation4]]
      %s470 = sld [smem:[#allocation4 + $0x1]]
      %s471 = sld [smem:[#allocation4 + $0x2]]
      %s472 = sld [smem:[#allocation4 + $0x3]]
      %s473 = sld [smem:[#allocation4 + $0x4]]
      %s474 = sld [smem:[#allocation4 + $0x5]]
      %s475 = sld [smem:[#allocation4 + $0x6]]
      %s476 = sld [smem:[#allocation4 + $0x7]]
      %s477 = sld [smem:[#allocation4 + $0x8]]
      %s478 = sld [smem:[#allocation4 + $0x9]]
      %s479 = sld [smem:[#allocation4 + $0xa]]
      %s480 = sld [smem:[#allocation4 + $0xb]]
      %s481 = sld [smem:[#allocation4 + $0xc]]
      %s482 = sld [smem:[#allocation4 + $0xd]]
      %s483 = sld [smem:[#allocation4 + $0xe]]
      %s484 = sld [smem:[#allocation4 + $0xf]]
      %s485 = sld [smem:[#allocation4 + $0x10]]
      %s486 = sld [smem:[#allocation4 + $0x11]]
      %s487 = sld [smem:[#allocation4 + $0x12]]
      %v488 = vlaneseq
      %v489 = vand.u32 %v488, 127
      %v490 = vadd.s32 %v489, 128
      %vm491 = vcmp.lt.s32.totalorder %v489, 0
      %v492 = vsub.s32 0, %v489
      %v493 = vsel %vm491, %v492, %v489
      %v494 = vshrl.u32 %v493, 4
      %v495 = vand.u32 %v493, 15
      %v496 = vsub.s32 0, %v495
      %v497 = vsel %vm491, %v496, %v495
      %vm498 = vcmp.lt.s32.totalorder %v490, 0
      %v499 = vsub.s32 0, %v490
      %v500 = vsel %vm498, %v499, %v490
      %v501 = vshrl.u32 %v500, 4
      %v502 = vand.u32 %v500, 15
      %v503 = vsub.s32 0, %v502
      %v504 = vsel %vm498, %v503, %v502
      %vm505 = vcmp.lt.s32.totalorder %v489, 0
      %v506 = vsub.s32 0, %v489
      %v507 = vsel %vm505, %v506, %v489
      %v508 = vshrl.u32 %v507, 4
      %v509 = vand.u32 %v507, 15
      %v510 = vsub.s32 0, %v508
      %v511 = vsel %vm505, %v510, %v508
      %vm512 = vcmp.lt.s32.totalorder %v490, 0
      %v513 = vsub.s32 0, %v490
      %v514 = vsel %vm512, %v513, %v490
      %v515 = vshrl.u32 %v514, 4
      %v516 = vand.u32 %v514, 15
      %v517 = vsub.s32 0, %v515
      %v518 = vsel %vm512, %v517, %v515
      %vm519 = vcmp.ge.s32.totalorder %v497, 1
      %vm520 = vcmp.ge.s32.totalorder %v504, 1
      %vm521 = vcmp.le.s32.totalorder %v497, 14
      %vm522 = vcmp.le.s32.totalorder %v504, 14
      %vm523 = vcmp.ge.s32.totalorder %v511, 1
      %vm524 = vcmp.ge.s32.totalorder %v518, 1
      %vm525 = vcmp.le.s32.totalorder %v511, 14
      %vm526 = vcmp.le.s32.totalorder %v518, 14
      %v527 = vstv %s473
      %v528 = vmul.f32 %v527, %v463
      %v529 = vmul.f32 %v527, %v464
      %v530 = vstv %s482
      %v531 = vmul.f32 %v530, %v467
      %v532 = vmul.f32 %v530, %v468
      %v533 = vadd.f32 %v528, %v531
      %v534 = vadd.f32 %v529, %v532
      %535 = vrot.lane.b32.xlu0 %v463, 17
      %v536 = vpop.permute.xlu0 %535
      %537 = vrot.lane.b32.xlu0 %v464, 17
      %v538 = vpop.permute.xlu0 %537
      %vm539 = vcmp.lt.s32.totalorder %v489, 17
      %v540 = vsel %vm539, %v536, %v538
      %v541 = vsel %vm539, %v538, %v536
      %542 = vrot.lane.b32.xlu0 %v467, 17
      %v543 = vpop.permute.xlu0 %542
      %544 = vrot.lane.b32.xlu0 %v468, 17
      %v545 = vpop.permute.xlu0 %544
      %v546 = vsel %vm539, %v543, %v545
      %v547 = vsel %vm539, %v545, %v543
      %v548 = vstv %s469
      %v549 = vmul.f32 %v548, %v541
      %v550 = vmul.f32 %v548, %v540
      %v551 = vstv %s478
      %v552 = vmul.f32 %v551, %v547
      %v553 = vmul.f32 %v551, %v546
      %v554 = vadd.f32 %v549, %v552
      %v555 = vadd.f32 %v550, %v553
      %vm556 = vmand %vm523, %vm519
      %vm557 = vmand %vm524, %vm520
      %v558 = vsel %vm556, %v554, 0.0
      %v559 = vsel %vm557, %v555, 0.0
      %v560 = vadd.f32 %v533, %v558
      %v561 = vadd.f32 %v534, %v559
      %562 = vrot.lane.b32.xlu0 %v463, 16
      %v563 = vpop.permute.xlu0 %562
      %564 = vrot.lane.b32.xlu0 %v464, 16
      %v565 = vpop.permute.xlu0 %564
      %vm566 = vcmp.lt.s32.totalorder %v489, 16
      %v567 = vsel %vm566, %v563, %v565
      %v568 = vsel %vm566, %v565, %v563
      %569 = vrot.lane.b32.xlu0 %v467, 16
      %v570 = vpop.permute.xlu0 %569
      %571 = vrot.lane.b32.xlu0 %v468, 16
      %v572 = vpop.permute.xlu0 %571
      %v573 = vsel %vm566, %v570, %v572
      %v574 = vsel %vm566, %v572, %v570
      %v575 = vstv %s470
      %v576 = vmul.f32 %v575, %v568
      %v577 = vmul.f32 %v575, %v567
      %v578 = vstv %s479
      %v579 = vmul.f32 %v578, %v574
      %v580 = vmul.f32 %v578, %v573
      %v581 = vadd.f32 %v576, %v579
      %v582 = vadd.f32 %v577, %v580
      %v583 = vsel %vm523, %v581, 0.0
      %v584 = vsel %vm524, %v582, 0.0
      %v585 = vadd.f32 %v560, %v583
      %v586 = vadd.f32 %v561, %v584
      %587 = vrot.lane.b32.xlu0 %v463, 15
      %v588 = vpop.permute.xlu0 %587
      %589 = vrot.lane.b32.xlu0 %v464, 15
      %v590 = vpop.permute.xlu0 %589
      %vm591 = vcmp.lt.s32.totalorder %v489, 15
      %v592 = vsel %vm591, %v588, %v590
      %v593 = vsel %vm591, %v590, %v588
      %594 = vrot.lane.b32.xlu0 %v467, 15
      %v595 = vpop.permute.xlu0 %594
      %596 = vrot.lane.b32.xlu0 %v468, 15
      %v597 = vpop.permute.xlu0 %596
      %v598 = vsel %vm591, %v595, %v597
      %v599 = vsel %vm591, %v597, %v595
      %v600 = vstv %s471
      %v601 = vmul.f32 %v600, %v593
      %v602 = vmul.f32 %v600, %v592
      %v603 = vstv %s480
      %v604 = vmul.f32 %v603, %v599
      %v605 = vmul.f32 %v603, %v598
      %v606 = vadd.f32 %v601, %v604
      %v607 = vadd.f32 %v602, %v605
      %vm608 = vmand %vm523, %vm521
      %vm609 = vmand %vm524, %vm522
      %v610 = vsel %vm608, %v606, 0.0
      %v611 = vsel %vm609, %v607, 0.0
      %v612 = vadd.f32 %v585, %v610
      %v613 = vadd.f32 %v586, %v611
      %614 = vrot.lane.b32.xlu0 %v463, 1
      %v615 = vpop.permute.xlu0 %614
      %616 = vrot.lane.b32.xlu0 %v464, 1
      %v617 = vpop.permute.xlu0 %616
      %vm618 = vcmp.lt.s32.totalorder %v489, 1
      %v619 = vsel %vm618, %v615, %v617
      %v620 = vsel %vm618, %v617, %v615
      %621 = vrot.lane.b32.xlu0 %v467, 1
      %v622 = vpop.permute.xlu0 %621
      %623 = vrot.lane.b32.xlu0 %v468, 1
      %v624 = vpop.permute.xlu0 %623
      %v625 = vsel %vm618, %v622, %v624
      %v626 = vsel %vm618, %v624, %v622
      %v627 = vstv %s472
      %v628 = vmul.f32 %v627, %v620
      %v629 = vmul.f32 %v627, %v619
      %v630 = vstv %s481
      %v631 = vmul.f32 %v630, %v626
      %v632 = vmul.f32 %v630, %v625
      %v633 = vadd.f32 %v628, %v631
      %v634 = vadd.f32 %v629, %v632
      %v635 = vsel %vm519, %v633, 0.0
      %v636 = vsel %vm520, %v634, 0.0
      %v637 = vadd.f32 %v612, %v635
      %v638 = vadd.f32 %v613, %v636
      %639 = vrot.lane.b32.xlu0 %v463, 127
      %v640 = vpop.permute.xlu0 %639
      %641 = vrot.lane.b32.xlu0 %v464, 127
      %v642 = vpop.permute.xlu0 %641
      %vm643 = vcmp.lt.s32.totalorder %v489, 127
      %v644 = vsel %vm643, %v640, %v642
      %v645 = vsel %vm643, %v642, %v640
      %646 = vrot.lane.b32.xlu0 %v467, 127
      %v647 = vpop.permute.xlu0 %646
      %648 = vrot.lane.b32.xlu0 %v468, 127
      %v649 = vpop.permute.xlu0 %648
      %v650 = vsel %vm643, %v647, %v649
      %v651 = vsel %vm643, %v649, %v647
      %v652 = vstv %s474
      %v653 = vmul.f32 %v652, %v644
      %v654 = vmul.f32 %v652, %v645
      %v655 = vstv %s483
      %v656 = vmul.f32 %v655, %v650
      %v657 = vmul.f32 %v655, %v651
      %v658 = vadd.f32 %v653, %v656
      %v659 = vadd.f32 %v654, %v657
      %v660 = vsel %vm521, %v658, 0.0
      %v661 = vsel %vm522, %v659, 0.0
      %v662 = vadd.f32 %v637, %v660
      %v663 = vadd.f32 %v638, %v661
      %664 = vrot.lane.b32.xlu0 %v463, 113
      %v665 = vpop.permute.xlu0 %664
      %666 = vrot.lane.b32.xlu0 %v464, 113
      %v667 = vpop.permute.xlu0 %666
      %vm668 = vcmp.lt.s32.totalorder %v489, 113
      %v669 = vsel %vm668, %v665, %v667
      %v670 = vsel %vm668, %v667, %v665
      %671 = vrot.lane.b32.xlu0 %v467, 113
      %v672 = vpop.permute.xlu0 %671
      %673 = vrot.lane.b32.xlu0 %v468, 113
      %v674 = vpop.permute.xlu0 %673
      %v675 = vsel %vm668, %v672, %v674
      %v676 = vsel %vm668, %v674, %v672
      %v677 = vstv %s475
      %v678 = vmul.f32 %v677, %v669
      %v679 = vmul.f32 %v677, %v670
      %v680 = vstv %s484
      %v681 = vmul.f32 %v680, %v675
      %v682 = vmul.f32 %v680, %v676
      %v683 = vadd.f32 %v678, %v681
      %v684 = vadd.f32 %v679, %v682
      %vm685 = vmand %vm525, %vm519
      %vm686 = vmand %vm526, %vm520
      %v687 = vsel %vm685, %v683, 0.0
      %v688 = vsel %vm686, %v684, 0.0
      %v689 = vadd.f32 %v662, %v687
      %v690 = vadd.f32 %v663, %v688
      %691 = vrot.lane.b32.xlu0 %v463, 112
      %v692 = vpop.permute.xlu0 %691
      %693 = vrot.lane.b32.xlu0 %v464, 112
      %v694 = vpop.permute.xlu0 %693
      %vm695 = vcmp.lt.s32.totalorder %v489, 112
      %v696 = vsel %vm695, %v692, %v694
      %v697 = vsel %vm695, %v694, %v692
      %698 = vrot.lane.b32.xlu0 %v467, 112
      %v699 = vpop.permute.xlu0 %698
      %700 = vrot.lane.b32.xlu0 %v468, 112
      %v701 = vpop.permute.xlu0 %700
      %v702 = vsel %vm695, %v699, %v701
      %v703 = vsel %vm695, %v701, %v699
      %v704 = vstv %s476
      %v705 = vmul.f32 %v704, %v696
      %v706 = vmul.f32 %v704, %v697
      %v707 = vstv %s485
      %v708 = vmul.f32 %v707, %v702
      %v709 = vmul.f32 %v707, %v703
      %v710 = vadd.f32 %v705, %v708
      %v711 = vadd.f32 %v706, %v709
      %v712 = vsel %vm525, %v710, 0.0
      %v713 = vsel %vm526, %v711, 0.0
      %v714 = vadd.f32 %v689, %v712
      %v715 = vadd.f32 %v690, %v713
      %716 = vrot.lane.b32.xlu0 %v463, 111
      %v717 = vpop.permute.xlu0 %716
      %718 = vrot.lane.b32.xlu0 %v464, 111
      %v719 = vpop.permute.xlu0 %718
      %vm720 = vcmp.lt.s32.totalorder %v489, 111
      %v721 = vsel %vm720, %v717, %v719
      %v722 = vsel %vm720, %v719, %v717
      %723 = vrot.lane.b32.xlu0 %v467, 111
      %v724 = vpop.permute.xlu0 %723
      %725 = vrot.lane.b32.xlu0 %v468, 111
      %v726 = vpop.permute.xlu0 %725
      %v727 = vsel %vm720, %v724, %v726
      %v728 = vsel %vm720, %v726, %v724
      %v729 = vstv %s477
      %v730 = vmul.f32 %v729, %v721
      %v731 = vmul.f32 %v729, %v722
      %v732 = vstv %s486
      %v733 = vmul.f32 %v732, %v727
      %v734 = vmul.f32 %v732, %v728
      %v735 = vadd.f32 %v730, %v733
      %v736 = vadd.f32 %v731, %v734
      %vm737 = vmand %vm525, %vm521
      %vm738 = vmand %vm526, %vm522
      %v739 = vsel %vm737, %v735, 0.0
      %v740 = vsel %vm738, %v736, 0.0
      %v741 = vadd.f32 %v714, %v739
      %v742 = vadd.f32 %v715, %v740
      %v743 = vstv %s487
      %v744 = vadd.f32 %v741, %v743
      %v745 = vadd.f32 %v742, %v743
      %v746 = vxor.u32 %v744, 2147483648
      %v747 = vxor.u32 %v745, 2147483648
      %v748 = vmul.f32 %v746, 1.442695
      %v749 = vpow.pop %v748
      %v750 = vmul.f32 %v747, 1.442695
      %v751 = vpow.pop %v750
      %v752 = vadd.f32 %v749, 1.0
      %v753 = vadd.f32 %v751, 1.0
      %v754 = vrcp.pop %v752
      %v755 = vmul.f32 1.0, %v754
      %v756 = vrcp.pop %v753
      %v757 = vmul.f32 1.0, %v756
      %758 = vst [vmem:[#allocation9] sm:$0xff] %v755
      %759 = vst [vmem:[#allocation9 + $0x8] sm:$0xff] %v757
    $region29: #{tpu_custom_call.1} parent=1 // pred_fallthru
      _
    // Predicated region
    $region30: #{tpu_custom_call.1} parent=1 // pred_check
      _
    $region31: #{tpu_custom_call.1} parent=1 // pred_check_branch
      %761 = sbr.rel (0) target = $region33
    $region32: #{tpu_custom_call.1} parent=1 // pred_region
      %s763 = ssub.s32 256, 256
      %764 = vsyncadd [#allocation6], %s763
      %s766 = sshll.u32 [#allocation9], 4
      %s767 = int_to_ptr.vmem [resolvable:$true] %s766
      %769 = dma.vmem_to_hbm [thread:$0]  %s767, 256, %s2, [#allocation6]
    $region33: #{tpu_custom_call.1} parent=1 // pred_fallthru
      _
    // Predicated region
    $region34: #{tpu_custom_call.1} parent=1 // pred_check
      _
    $region35: #{tpu_custom_call.1} parent=1 // pred_check_branch
      %771 = sbr.rel (0) target = $region37
    $region36: #{tpu_custom_call.1} parent=1 // pred_region
      %772 = dma.done [#allocation6], 256
    $region37: #{tpu_custom_call.1} parent=1 // pred_fallthru
      _
    %773 = vsyncpa [#allocation5], 1
    %774 = vsyncpa [#allocation6], 1
    %775 = vsyncpa [#allocation7], 1

</llo_original>
